<compile_context>
chip_gen: v6e
topology: v6e:2x2x1
jax: 0.10.0
libtpu: 0.0.40
codegen_flags: <defaults>
</compile_context>

<pallas_src>
import jax
import jax.numpy as jnp
from jax.experimental import pallas as pl
from jax.experimental.pallas import tpu as pltpu


# ---------------------------------------------------------------------------
# Kernel
# ---------------------------------------------------------------------------
def _fs_kernel(x_ref, z_ref, out_ref):
    """out = x * clamp(z + 0.5, 0, 1); z is the pre-combined mu + sigma*noise."""
    gate = jnp.clip(z_ref[...] + 0.5, 0.0, 1.0)            # f32, (1, tile_d)
    if out_ref.dtype != jnp.float32:
        # bf16 multiply on v6e/v7x (halves vreg pressure); gate clamped in f32.
        gate = gate.astype(out_ref.dtype)
    out_ref[...] = (x_ref[...] * gate).astype(out_ref.dtype)


# ---------------------------------------------------------------------------
# Wrapper
# ---------------------------------------------------------------------------
_SUBLANE_MIN = {4: 8, 2: 16, 1: 32}   # native sublane count per itemsize


def _round_up(x, m):
    return ((x + m - 1) // m) * m


def feature_selector_forward(prev_x, mu, noise=None, *, sigma, training=True,
                             donate_input=False):
    """prev_x: (B, D); mu, noise: (D,). Returns prev_x * hard_sigmoid(z)."""
    B, D = prev_x.shape
    out_dtype = prev_x.dtype
    itemsize = jnp.dtype(out_dtype).itemsize
    sub_min = _SUBLANE_MIN.get(itemsize, 8)

    if training and noise is None:
        raise ValueError("noise is required when training=True")

    # Pre-combine the tiny (D,) gate pre-activation once in the wrapper.
    z = mu.astype(jnp.float32)
    if training:
        z = z + jnp.float32(sigma) * noise.astype(jnp.float32)

    # --- generation-aware budgets --------------------------------------------
    try:
        vmem_cap = int(getattr(pltpu.get_tpu_info(), "vmem_capacity_bytes", 64 << 20))
    except Exception:
        vmem_cap = 64 << 20
    if vmem_cap <= (64 << 20):                    # v7x-class: 64 MiB physical VMEM
        tile_budget, vmem_ceiling = 4 << 20, 48 << 20
    else:                                         # v5e / v6e: 128 MiB physical VMEM
        tile_budget, vmem_ceiling = 8 << 20, 96 << 20

    # --- small-D lane folding (keeps stores lane-dense without padding waste) -
    x = prev_x
    folded = False
    if D < 128:
        N = B * D
        for W in (1024, 512, 256, 128):
            if W % D == 0 and N % W == 0:
                x = prev_x.reshape(N // W, W)
                z = jnp.tile(z, W // D)
                folded = True
                break
    Bk, Dk = x.shape

    # --- pad ragged feature dim to a multiple of 128 (sliced off afterwards) --
    Dk_pad = Dk if Dk % 128 == 0 else _round_up(Dk, 128)

    # --- tile selection --------------------------------------------------------
    if Dk_pad * sub_min * itemsize <= tile_budget:
        tile_d = Dk_pad            # full rows: contiguous DMAs, gate block resident
    else:
        tile_d = 128
        for cand in (4096, 2048, 1024, 512, 256):
            if Dk_pad % cand == 0 and cand * sub_min * itemsize <= tile_budget:
                tile_d = cand
                break

    max_rows = max(sub_min,
                   (tile_budget // (tile_d * itemsize)) // sub_min * sub_min)
    tile_b = min(max_rows, _round_up(Bk, sub_min))
    Bk_pad = _round_up(Bk, tile_b)

    # v7x has 2 TensorCores: keep >= 2 parallel grid steps when possible.
    if (Bk_pad // tile_b) * (Dk_pad // tile_d) == 1 and tile_b > sub_min:
        tile_b = max(sub_min, _round_up((Bk + 1) // 2, sub_min))
        Bk_pad = _round_up(Bk, tile_b)

    padded = (Bk_pad != Bk) or (Dk_pad != Dk)
    if padded:
        x = jnp.pad(x, ((0, Bk_pad - Bk), (0, Dk_pad - Dk)))
    if Dk_pad != Dk:
        z = jnp.pad(z, (0, Dk_pad - Dk))
    z2d = z.reshape(1, Dk_pad)

    grid_b = Bk_pad // tile_b
    grid_d = Dk_pad // tile_d

    if grid_d == 1:
        grid = (grid_b,)
        x_spec = pl.BlockSpec((tile_b, Dk_pad), lambda i: (i, 0))
        z_spec = pl.BlockSpec((1, Dk_pad), lambda i: (0, 0))    # resident over batch
        out_spec = pl.BlockSpec((tile_b, Dk_pad), lambda i: (i, 0))
        dims = ("parallel",)
    else:
        grid = (grid_b, grid_d)
        x_spec = pl.BlockSpec((tile_b, tile_d), lambda i, j: (i, j))
        z_spec = pl.BlockSpec((1, tile_d), lambda i, j: (0, j))
        out_spec = pl.BlockSpec((tile_b, tile_d), lambda i, j: (i, j))
        dims = ("parallel", "parallel")

    # VMEM budget: (x + out) double-buffered + gate rows, 2x headroom.
    tile_bytes = tile_b * tile_d * itemsize
    vmem_needed = 2 * 2 * tile_bytes + 2 * tile_d * 4
    vmem_limit = int(min(vmem_ceiling, max(8 << 20, 2 * vmem_needed)))

    cost = pl.CostEstimate(
        flops=3 * Bk_pad * Dk_pad,
        transcendentals=0,
        bytes_accessed=2 * Bk_pad * Dk_pad * itemsize + Dk_pad * 4,
    )

    # Donate only when the kernel input is literally prev_x's buffer
    # (fold/pad would materialize a copy and make the alias pointless).
    alias = {0: 0} if (donate_input and not folded and not padded) else {}

    out = pl.pallas_call(
        _fs_kernel,
        out_shape=jax.ShapeDtypeStruct((Bk_pad, Dk_pad), out_dtype),
        grid_spec=pltpu.PrefetchScalarGridSpec(
            num_scalar_prefetch=0,
            grid=grid,
            in_specs=[x_spec, z_spec],
            out_specs=out_spec,
        ),
        compiler_params=pltpu.CompilerParams(
            dimension_semantics=dims,
            vmem_limit_bytes=vmem_limit,
        ),
        cost_estimate=cost,
        input_output_aliases=alias,
    )(x, z2d)

    out = out[:Bk, :Dk]
    return out.reshape(B, D) if folded else out


# ---------------------------------------------------------------------------
# Demo / correctness check
# ---------------------------------------------------------------------------
if __name__ == "__main__":
    key = jax.random.PRNGKey(0)
    k_x, k_noise, k_mu, k_x2, k_x3 = jax.random.split(key, 5)
    sigma = 0.5

    # Case 1: lane-aligned shape -> 1-D grid over batch, full-row tiles.
    B1, D1 = 256, 256
    x1 = jax.random.normal(k_x, (B1, D1), dtype=jnp.float32)
    noise1 = jax.random.normal(k_noise, (D1,), dtype=jnp.float32)
    mu1 = 0.1 * jax.random.normal(k_mu, (D1,), dtype=jnp.float32)

    out1 = feature_selector_forward(x1, mu1, noise1, sigma=sigma, training=True)
    out1 = jax.block_until_ready(out1)
    gate1 = jnp.clip(mu1 + sigma * noise1 + 0.5, 0.0, 1.0)
    ref1 = x1 * gate1[None, :]
    assert jnp.allclose(out1, ref1, atol=1e-6, rtol=1e-6), "mismatch (train, 256x256)"

    # Eval path (noise dropped: z = mu).
    out1e = feature_selector_forward(x1, mu1, None, sigma=sigma, training=False)
    out1e = jax.block_until_ready(out1e)
    ref1e = x1 * jnp.clip(mu1 + 0.5, 0.0, 1.0)[None, :]
    assert jnp.allclose(out1e, ref1e, atol=1e-6, rtol=1e-6), "mismatch (eval, 256x256)"

    # Case 2: small D -> lane-folded path (output stays lane-dense).
    B2, D2 = 16, 32
    x2 = jax.random.normal(k_x2, (B2, D2), dtype=jnp.float32)
    noise2 = jax.random.normal(k_noise, (D2,), dtype=jnp.float32)
    mu2 = 0.1 * jax.random.normal(k_mu, (D2,), dtype=jnp.float32)

    out2 = feature_selector_forward(x2, mu2, noise2, sigma=sigma, training=True)
    out2 = jax.block_until_ready(out2)
    gate2 = jnp.clip(mu2 + sigma * noise2 + 0.5, 0.0, 1.0)
    ref2 = x2 * gate2[None, :]
    assert jnp.allclose(out2, ref2, atol=1e-6, rtol=1e-6), "mismatch (train, 16x32)"

    # Case 3: ragged shape -> pad-and-slice path (no full-extent fallback tiles).
    B3, D3 = 5, 200
    x3 = jax.random.normal(k_x3, (B3, D3), dtype=jnp.float32)
    noise3 = jax.random.normal(k_noise, (D3,), dtype=jnp.float32)
    mu3 = 0.1 * jax.random.normal(k_mu, (D3,), dtype=jnp.float32)

    out3 = feature_selector_forward(x3, mu3, noise3, sigma=sigma, training=True)
    out3 = jax.block_until_ready(out3)
    gate3 = jnp.clip(mu3 + sigma * noise3 + 0.5, 0.0, 1.0)
    ref3 = x3 * gate3[None, :]
    assert jnp.allclose(out3, ref3, atol=1e-6, rtol=1e-6), "mismatch (train, 5x200)"

    # Case 4: bf16 I/O (gate clamped in f32, multiply in bf16).
    x4 = x1.astype(jnp.bfloat16)
    out4 = feature_selector_forward(x4, mu1, noise1, sigma=sigma, training=True)
    out4 = jax.block_until_ready(out4)
    ref4 = (x4.astype(jnp.float32) * gate1[None, :]).astype(jnp.bfloat16)
    assert jnp.allclose(out4.astype(jnp.float32), ref4.astype(jnp.float32),
                        atol=5e-2, rtol=5e-2), "mismatch (train, bf16)"

    print("KERNEL_OK")
</pallas_src>

<mosaic_0001>
module attributes {stable_mosaic.version = 11 : i64} {
  func.func @_fs_kernel(%arg0: i32, %arg1: memref<128x256xf32, #tpu.memory_space<vmem>>, %arg2: memref<1x256xf32, #tpu.memory_space<vmem>>, %arg3: memref<128x256xf32, #tpu.memory_space<vmem>>) attributes {dimension_semantics = [#tpu.dimension_semantics<parallel>], iteration_bounds = array<i64: 2>, scalar_prefetch = 0 : i64, scratch_operands = 0 : i64, tpu.core_type = #tpu.core_type<tc>, window_params = [{transform_indices = @transform_0, window_bounds = array<i64: 128, 256>}, {pipeline_mode = #tpu.pipeline_mode<synchronous>, transform_indices = @transform_1, window_bounds = array<i64: 1, 256>}, {transform_indices = @transform_2, window_bounds = array<i64: 128, 256>}]} {
    %c0 = arith.constant 0 : index
    %c0_0 = arith.constant 0 : index
    %0 = vector.load %arg2[%c0, %c0_0] : memref<1x256xf32, #tpu.memory_space<vmem>>, vector<1x256xf32>
    %cst = arith.constant 5.000000e-01 : f32
    %1 = vector.broadcast %cst : f32 to vector<1x256xf32>
    %2 = arith.addf %0, %1 : vector<1x256xf32>
    %cst_1 = arith.constant 0.000000e+00 : f32
    %cst_2 = arith.constant 1.000000e+00 : f32
    %3 = vector.broadcast %cst_1 : f32 to vector<1x256xf32>
    %4 = arith.maximumf %3, %2 : vector<1x256xf32>
    %5 = vector.broadcast %cst_2 : f32 to vector<1x256xf32>
    %6 = arith.minimumf %5, %4 : vector<1x256xf32>
    %c0_3 = arith.constant 0 : index
    %c0_4 = arith.constant 0 : index
    %7 = vector.load %arg1[%c0_3, %c0_4] : memref<128x256xf32, #tpu.memory_space<vmem>>, vector<128x256xf32>
    %8 = vector.broadcast %6 : vector<1x256xf32> to vector<128x256xf32>
    %9 = arith.mulf %7, %8 : vector<128x256xf32>
    %c0_5 = arith.constant 0 : index
    %c0_6 = arith.constant 0 : index
    %10 = vector.load %arg3[%c0_5, %c0_6] : memref<128x256xf32, #tpu.memory_space<vmem>>, vector<128x256xf32>
    tpu.vector_store %arg3[%c0_5, %c0_6], %9 {strides = array<i32>} : memref<128x256xf32, #tpu.memory_space<vmem>>, vector<128x256xf32>,
    return
  }
  func.func @transform_0(%arg0: i32) -> (i32, i32) {
    %c0_i32 = arith.constant 0 : i32
    %c0_i32_0 = arith.constant 0 : i32
    return %arg0, %c0_i32 : i32, i32
  }
  func.func @transform_1(%arg0: i32) -> (i32, i32) {
    %c0_i32 = arith.constant 0 : i32
    %c0_i32_0 = arith.constant 0 : i32
    %c0_i32_1 = arith.constant 0 : i32
    return %c0_i32, %c0_i32_0 : i32, i32
  }
  func.func @transform_2(%arg0: i32) -> (i32, i32) {
    %c0_i32 = arith.constant 0 : i32
    %c0_i32_0 = arith.constant 0 : i32
    return %arg0, %c0_i32 : i32, i32
  }
}

</mosaic_0001>

<llo_original>
// kernel: tpu_custom_call.1
$region0: #{tpu_custom_call.1}
  #allocation0 [shape = 'u32[]', space=smem, size = 0x4, offset = 0x4, fixed_abs, tag = 'smem constant byte address 0x4 - core index']
  #allocation1 [shape = 'u32[144,128]{1,0:T(1,128)}', space=vmem, size = 0x12000, scoped, tag = 'internal scratch']
  %s0 = inlined_call_operand.hbm [shape: f32[256,256], index: 0, kind: input, shape index: {}]
  %s1 = inlined_call_operand.hbm [shape: f32[1,256], index: 1, kind: input, shape index: {}]
  %s2 = inlined_call_operand.hbm [shape: f32[256,256], index: 2, kind: output, shape index: {}]
  %s3 = sld [smem:[#allocation0]]
  $region49: #{tpu_custom_call.1} parent=0
    _
  %s5 = ssub.s32 1, %s3
  %s6 = scalar_select 0, %s5, %s3
  $region1: #{tpu_custom_call.1} parent=0
    #allocation2 [shape = 'u8[262144]{0}', space=vmem, size = 0x40000, scoped, tag = 'input window, operand 0']
    #allocation3 [shape = 's32[2]{0}', space=sflag, size = 0x8, scoped, tag = 'scoped memory for tpu_custom_call.1']
    #allocation4 [shape = 's32[2]{0}', space=sflag, size = 0x8, scoped, tag = 'scoped memory for tpu_custom_call.1']
    #allocation5 [shape = 'u8[1024]{0}', space=vmem, size = 0x400, scoped, tag = 'input window, operand 1, single buffered']
    #allocation6 [shape = 's32[1]{0}', space=sflag, size = 0x4, scoped, tag = 'scoped memory for tpu_custom_call.1']
    #allocation7 [shape = 'u8[262144]{0}', space=vmem, size = 0x40000, scoped, tag = 'output window, operand 0']
    %7 = vsyncpa [#allocation3], 0
    %s8 = scalar_lea.sflag [#allocation3], 1
    %9 = vsyncpa %s8, 0
    %10 = vsyncpa [#allocation6], 0
    %11 = vsyncpa [#allocation4], 0
    %s12 = scalar_lea.sflag [#allocation4], 1
    %13 = vsyncpa %s12, 0
    loop: start=0, step=1, limit=4
    $region2: #{tpu_custom_call.1} parent=1 // loop_pre_header
      _
    $region3: #{tpu_custom_call.1} parent=1 // loop_header
      %s15 = sphi 0, %s19
      %p16 = scmp.ge.s32.totalorder %s15, 4
      %s25 = sphi 0, %s27
      %s28 = sphi 0, %s25
      %s29 = sphi 0, %s28
      %s45 = sphi 0, %s29
      %s49 = sphi 0, %s49
      %s51 = sphi 0, %s49
      %s52 = sphi 0, %s51
      %s66 = sphi 0, %s52
      %s72 = sphi 0, %s74
      %s75 = sphi 0, %s72
      %s76 = sphi 0, %s75
      %s92 = sphi 0, %s76
    $region4: #{tpu_custom_call.1} parent=1 // loop_header_branch
      %18 = sbr.rel (%p16) target = $region8
    $region5: #{tpu_custom_call.1} parent=1 // loop_body
      %s20 = ssub.s32 %s15, 1
      %s21 = ssub.s32 %s15, 2
      %s22 = sadd.s32 %s15, 1
      %s23 = ssub.s32 %s15, %s22
      %p24 = scmp.eq.s32.totalorder %s23, 0
      %s26 = sadd.s32 %s25, 1
      %s27 = scalar_select %p24, %s25, %s26
      %p30 = pneg %p24
      %p31 = scmp.eq.s32.totalorder %s15, 1
      %p32 = por %p30, %p31
      %p33 = scmp.ne.s32.totalorder %s25, %s28
      %p34 = scmp.eq.s32.totalorder %s15, 0
      %p35 = por %p33, %p34
      %p36 = scmp.ne.s32.totalorder %s25, %s28
      %p37 = scmp.eq.s32.totalorder %s20, 1
      %p38 = por %p36, %p37
      %p39 = scmp.ne.s32.totalorder %s28, %s29
      %p40 = scmp.eq.s32.totalorder %s20, 0
      %p41 = por %p39, %p40
      %p42 = scmp.ne.s32.totalorder %s28, %s29
      %p43 = scmp.eq.s32.totalorder %s21, 1
      %p44 = por %p42, %p43
      %p46 = scmp.ne.s32.totalorder %s29, %s45
      %p47 = scmp.eq.s32.totalorder %s21, 0
      %p48 = por %p46, %p47
      %s50 = sadd.s32 %s49, 1
      %p53 = scmp.eq.s32.totalorder %s15, 1
      %p54 = scmp.ne.s32.totalorder %s49, %s51
      %p55 = scmp.eq.s32.totalorder %s15, 0
      %p56 = por %p54, %p55
      %p57 = scmp.ne.s32.totalorder %s49, %s51
      %p58 = scmp.eq.s32.totalorder %s20, 1
      %p59 = por %p57, %p58
      %p60 = scmp.ne.s32.totalorder %s51, %s52
      %p61 = scmp.eq.s32.totalorder %s20, 0
      %p62 = por %p60, %p61
      %p63 = scmp.ne.s32.totalorder %s51, %s52
      %p64 = scmp.eq.s32.totalorder %s21, 1
      %p65 = por %p63, %p64
      %p67 = scmp.ne.s32.totalorder %s52, %s66
      %p68 = scmp.eq.s32.totalorder %s21, 0
      %p69 = por %p67, %p68
      %s70 = ssub.s32 %s15, %s22
      %p71 = scmp.eq.s32.totalorder %s70, 0
      %s73 = sadd.s32 %s72, 1
      %s74 = scalar_select %p71, %s72, %s73
      %p77 = pneg %p71
      %p78 = scmp.eq.s32.totalorder %s15, 1
      %p79 = por %p77, %p78
      %p80 = scmp.ne.s32.totalorder %s72, %s75
      %p81 = scmp.eq.s32.totalorder %s15, 0
      %p82 = por %p80, %p81
      %p83 = scmp.ne.s32.totalorder %s72, %s75
      %p84 = scmp.eq.s32.totalorder %s20, 1
      %p85 = por %p83, %p84
      %p86 = scmp.ne.s32.totalorder %s75, %s76
      %p87 = scmp.eq.s32.totalorder %s20, 0
      %p88 = por %p86, %p87
      %p89 = scmp.ne.s32.totalorder %s75, %s76
      %p90 = scmp.eq.s32.totalorder %s21, 1
      %p91 = por %p89, %p90
      %p93 = scmp.ne.s32.totalorder %s76, %s92
      %p94 = scmp.eq.s32.totalorder %s21, 0
      %p95 = por %p93, %p94
      %p96 = scmp.le.s32.totalorder 1, %s15
      %p97 = scmp.lt.s32.totalorder %s15, 3
      %p98 = pnand %p96, %p97
      %p99 = pneg %p98
      // Predicated region
      $region9: #{tpu_custom_call.1} parent=5 // pred_check
        _
      $region10: #{tpu_custom_call.1} parent=5 // pred_check_branch
        %101 = sbr.rel (%p98) target = $region12
      $region11: #{tpu_custom_call.1} parent=5 // pred_region
        %s102 = ssub.s32 %s15, 1
        // Predicated region
        $region13: #{tpu_custom_call.1} parent=11 // pred_check
          %p103 = pneg %p62
        $region14: #{tpu_custom_call.1} parent=11 // pred_check_branch
          %105 = sbr.rel (%p103) target = $region16
        $region15: #{tpu_custom_call.1} parent=11 // pred_region
          %s107 = ssub.s32 32, 32
          %108 = vsyncadd [#allocation6], %s107
          %s110 = sshll.u32 [#allocation5], 4
          %s111 = int_to_ptr.vmem [resolvable:$true] %s110
          %113 = dma.hbm_to_vmem [thread:$0]  %s1, 32, %s111, [#allocation6]
        $region16: #{tpu_custom_call.1} parent=11 // pred_fallthru
          _
      $region12: #{tpu_custom_call.1} parent=5 // pred_fallthru
        _
      %p114 = scmp.lt.s32.totalorder %s15, 2
      // Predicated region
      $region17: #{tpu_custom_call.1} parent=5 // pred_check
        %p115 = pneg %p114
      $region18: #{tpu_custom_call.1} parent=5 // pred_check_branch
        %117 = sbr.rel (%p115) target = $region20
      $region19: #{tpu_custom_call.1} parent=5 // pred_region
        // Predicated region
        $region21: #{tpu_custom_call.1} parent=19 // pred_check
          %p118 = pneg %p35
        $region22: #{tpu_custom_call.1} parent=19 // pred_check_branch
          %120 = sbr.rel (%p118) target = $region24
        $region23: #{tpu_custom_call.1} parent=19 // pred_region
          %s121 = sand.u32 %s25, 1
          %s122 = scalar_lea.sflag [#allocation3], %s121
          %s123 = sand.u32 %s25, 1
          %s124 = smul.addr %s123, 256
          %s125 = scalar_lea.vmem [#allocation2], %s124
          %s126 = smul.u32 16, %s15
          %s128 = ssub.s32 4096, 4096
          %129 = vsyncadd %s122, %s128
          %s130 = smul.addr %s126, 2
          %s131 = smul.addr %s130, 128
          %s132 = scalar_lea.hbm %s0, %s131
          %s133 = sshll.u32 %s125, 4
          %s134 = int_to_ptr.vmem [resolvable:$true] %s133
          %139 = dma.hbm_to_vmem [thread:$0]  %s132, 4096, %s134, %s122, 256, 256, 16
        $region24: #{tpu_custom_call.1} parent=19 // pred_fallthru
          _
      $region20: #{tpu_custom_call.1} parent=5 // pred_fallthru
        _
      %p140 = scmp.le.s32.totalorder 1, %s15
      %p141 = scmp.lt.s32.totalorder %s15, 3
      %p142 = pnand %p140, %p141
      %p143 = pneg %p142
      // Predicated region
      $region25: #{tpu_custom_call.1} parent=5 // pred_check
        _
      $region26: #{tpu_custom_call.1} parent=5 // pred_check_branch
        %145 = sbr.rel (%p142) target = $region28
      $region27: #{tpu_custom_call.1} parent=5 // pred_region
        %s146 = ssub.s32 %s15, 1
        %s147 = sand.u32 %s28, 1
        %s148 = scalar_lea.sflag [#allocation3], %s147
        %s149 = sand.u32 %s28, 1
        %s150 = smul.addr %s149, 256
        %s151 = scalar_lea.vmem [#allocation2], %s150
        // Predicated region
        $region29: #{tpu_custom_call.1} parent=27 // pred_check
          %p152 = pneg %p41
        $region30: #{tpu_custom_call.1} parent=27 // pred_check_branch
          %154 = sbr.rel (%p152) target = $region32
        $region31: #{tpu_custom_call.1} parent=27 // pred_region
          %155 = dma.done %s148, 4096
        $region32: #{tpu_custom_call.1} parent=27 // pred_fallthru
          _
        // Predicated region
        $region33: #{tpu_custom_call.1} parent=27 // pred_check
          %p156 = pneg %p62
        $region34: #{tpu_custom_call.1} parent=27 // pred_check_branch
          %158 = sbr.rel (%p156) target = $region36
        $region35: #{tpu_custom_call.1} parent=27 // pred_region
          %159 = dma.done [#allocation6], 32
        $region36: #{tpu_custom_call.1} parent=27 // pred_fallthru
          _
        %s160 = sand.u32 %s28, 1
        %s161 = scalar_lea.sflag [#allocation3], %s160
        %s162 = sand.u32 %s28, 1
        %s163 = smul.addr %s162, 256
        %s164 = scalar_lea.vmem [#allocation2], %s163
        %p165 = pneg %p41
        %p166 = pneg %p38
        %p167 = pneg %p62
        %p168 = pneg %p59
        %p169 = pneg %p88
        %p170 = pneg %p85
        %s171 = sand.u32 %s75, 1
        %s172 = scalar_lea.sflag [#allocation4], %s171
        %s173 = sand.u32 %s75, 1
        %s174 = smul.addr %s173, 256
        %s175 = scalar_lea.vmem [#allocation7], %s174
        %s176 = smul.u32 16, %s20
        %s177 = smul.u32 16, %s20
        %v178 = vld [vmem:[#allocation5] sm:$0x3]
        %v179 = vadd.f32 %v178, 0.5
        %v180 = vmax.f32 %v179, 0.0
        %v181 = vmin.f32 %v180, 1.0
        %v182 = vld [vmem:[%s151] sm:$0xff]
        %v183 = vld [vmem:[%s151 + $0x8] sm:$0xff]
        %v184 = vld [vmem:[%s151 + $0x10] sm:$0xff]
        %v185 = vld [vmem:[%s151 + $0x18] sm:$0xff]
        %v186 = vld [vmem:[%s151 + $0x20] sm:$0xff]
        %v187 = vld [vmem:[%s151 + $0x28] sm:$0xff]
        %v188 = vld [vmem:[%s151 + $0x30] sm:$0xff]
        %v189 = vld [vmem:[%s151 + $0x38] sm:$0xff]
        %v190 = vld [vmem:[%s151 + $0x40] sm:$0xff]
        %v191 = vld [vmem:[%s151 + $0x48] sm:$0xff]
        %v192 = vld [vmem:[%s151 + $0x50] sm:$0xff]
        %v193 = vld [vmem:[%s151 + $0x58] sm:$0xff]
        %v194 = vld [vmem:[%s151 + $0x60] sm:$0xff]
        %v195 = vld [vmem:[%s151 + $0x68] sm:$0xff]
        %v196 = vld [vmem:[%s151 + $0x70] sm:$0xff]
        %v197 = vld [vmem:[%s151 + $0x78] sm:$0xff]
        %v198 = vld [vmem:[%s151 + $0x80] sm:$0xff]
        %v199 = vld [vmem:[%s151 + $0x88] sm:$0xff]
        %v200 = vld [vmem:[%s151 + $0x90] sm:$0xff]
        %v201 = vld [vmem:[%s151 + $0x98] sm:$0xff]
        %v202 = vld [vmem:[%s151 + $0xa0] sm:$0xff]
        %v203 = vld [vmem:[%s151 + $0xa8] sm:$0xff]
        %v204 = vld [vmem:[%s151 + $0xb0] sm:$0xff]
        %v205 = vld [vmem:[%s151 + $0xb8] sm:$0xff]
        %v206 = vld [vmem:[%s151 + $0xc0] sm:$0xff]
        %v207 = vld [vmem:[%s151 + $0xc8] sm:$0xff]
        %v208 = vld [vmem:[%s151 + $0xd0] sm:$0xff]
        %v209 = vld [vmem:[%s151 + $0xd8] sm:$0xff]
        %v210 = vld [vmem:[%s151 + $0xe0] sm:$0xff]
        %v211 = vld [vmem:[%s151 + $0xe8] sm:$0xff]
        %v212 = vld [vmem:[%s151 + $0xf0] sm:$0xff]
        %v213 = vld [vmem:[%s151 + $0xf8] sm:$0xff]
        %v215 = vlaneseq
        %v216 = vshrl.u32 %v215, 7
        %v217 = vsub.s32 0, %v216
        %v218 = vrot.slane %v181, %v217
        %v219 = vlaneseq
        %v220 = vshrl.u32 %v219, 7
        %v221 = vsub.s32 1, %v220
        %v222 = vrot.slane %v181, %v221
        %v225 = vmul.f32 %v182, %v218
        %v226 = vmul.f32 %v183, %v222
        %v227 = vmul.f32 %v184, %v218
        %v228 = vmul.f32 %v185, %v222
        %v229 = vmul.f32 %v186, %v218
        %v230 = vmul.f32 %v187, %v222
        %v231 = vmul.f32 %v188, %v218
        %v232 = vmul.f32 %v189, %v222
        %v233 = vmul.f32 %v190, %v218
        %v234 = vmul.f32 %v191, %v222
        %v235 = vmul.f32 %v192, %v218
        %v236 = vmul.f32 %v193, %v222
        %v237 = vmul.f32 %v194, %v218
        %v238 = vmul.f32 %v195, %v222
        %v239 = vmul.f32 %v196, %v218
        %v240 = vmul.f32 %v197, %v222
        %v241 = vmul.f32 %v198, %v218
        %v242 = vmul.f32 %v199, %v222
        %v243 = vmul.f32 %v200, %v218
        %v244 = vmul.f32 %v201, %v222
        %v245 = vmul.f32 %v202, %v218
        %v246 = vmul.f32 %v203, %v222
        %v247 = vmul.f32 %v204, %v218
        %v248 = vmul.f32 %v205, %v222
        %v249 = vmul.f32 %v206, %v218
        %v250 = vmul.f32 %v207, %v222
        %v251 = vmul.f32 %v208, %v218
        %v252 = vmul.f32 %v209, %v222
        %v253 = vmul.f32 %v210, %v218
        %v254 = vmul.f32 %v211, %v222
        %v255 = vmul.f32 %v212, %v218
        %v256 = vmul.f32 %v213, %v222
        %257 = vst [vmem:[%s175] sm:$0xff] %v225
        %258 = vst [vmem:[%s175 + $0x8] sm:$0xff] %v226
        %259 = vst [vmem:[%s175 + $0x10] sm:$0xff] %v227
        %260 = vst [vmem:[%s175 + $0x18] sm:$0xff] %v228
        %261 = vst [vmem:[%s175 + $0x20] sm:$0xff] %v229
        %262 = vst [vmem:[%s175 + $0x28] sm:$0xff] %v230
        %263 = vst [vmem:[%s175 + $0x30] sm:$0xff] %v231
        %264 = vst [vmem:[%s175 + $0x38] sm:$0xff] %v232
        %265 = vst [vmem:[%s175 + $0x40] sm:$0xff] %v233
        %266 = vst [vmem:[%s175 + $0x48] sm:$0xff] %v234
        %267 = vst [vmem:[%s175 + $0x50] sm:$0xff] %v235
        %268 = vst [vmem:[%s175 + $0x58] sm:$0xff] %v236
        %269 = vst [vmem:[%s175 + $0x60] sm:$0xff] %v237
        %270 = vst [vmem:[%s175 + $0x68] sm:$0xff] %v238
        %271 = vst [vmem:[%s175 + $0x70] sm:$0xff] %v239
        %272 = vst [vmem:[%s175 + $0x78] sm:$0xff] %v240
        %273 = vst [vmem:[%s175 + $0x80] sm:$0xff] %v241
        %274 = vst [vmem:[%s175 + $0x88] sm:$0xff] %v242
        %275 = vst [vmem:[%s175 + $0x90] sm:$0xff] %v243
        %276 = vst [vmem:[%s175 + $0x98] sm:$0xff] %v244
        %277 = vst [vmem:[%s175 + $0xa0] sm:$0xff] %v245
        %278 = vst [vmem:[%s175 + $0xa8] sm:$0xff] %v246
        %279 = vst [vmem:[%s175 + $0xb0] sm:$0xff] %v247
        %280 = vst [vmem:[%s175 + $0xb8] sm:$0xff] %v248
        %281 = vst [vmem:[%s175 + $0xc0] sm:$0xff] %v249
        %282 = vst [vmem:[%s175 + $0xc8] sm:$0xff] %v250
        %283 = vst [vmem:[%s175 + $0xd0] sm:$0xff] %v251
        %284 = vst [vmem:[%s175 + $0xd8] sm:$0xff] %v252
        %285 = vst [vmem:[%s175 + $0xe0] sm:$0xff] %v253
        %286 = vst [vmem:[%s175 + $0xe8] sm:$0xff] %v254
        %287 = vst [vmem:[%s175 + $0xf0] sm:$0xff] %v255
        %288 = vst [vmem:[%s175 + $0xf8] sm:$0xff] %v256
        %s289 = sand.u32 %s75, 1
        %s290 = scalar_lea.sflag [#allocation4], %s289
        %s291 = sand.u32 %s75, 1
        %s292 = smul.addr %s291, 256
        %s293 = scalar_lea.vmem [#allocation7], %s292
        // Predicated region
        $region37: #{tpu_custom_call.1} parent=27 // pred_check
          %p294 = pneg %p85
        $region38: #{tpu_custom_call.1} parent=27 // pred_check_branch
          %296 = sbr.rel (%p294) target = $region40
        $region39: #{tpu_custom_call.1} parent=27 // pred_region
          %s297 = smul.u32 16, %s20
          %s299 = ssub.s32 4096, 4096
          %300 = vsyncadd %s290, %s299
          %s301 = smul.addr %s297, 2
          %s302 = smul.addr %s301, 128
          %s303 = scalar_lea.hbm %s2, %s302
          %s304 = sshll.u32 %s293, 4
          %s305 = int_to_ptr.vmem [resolvable:$true] %s304
          %310 = dma.vmem_to_hbm [thread:$0]  %s305, 4096, %s303, %s290, 256, 256, 16
        $region40: #{tpu_custom_call.1} parent=27 // pred_fallthru
          _
      $region28: #{tpu_custom_call.1} parent=5 // pred_fallthru
        _
      %p311 = scmp.le.s32.totalorder 2, %s15
      // Predicated region
      $region41: #{tpu_custom_call.1} parent=5 // pred_check
        %p312 = pneg %p311
      $region42: #{tpu_custom_call.1} parent=5 // pred_check_branch
        %314 = sbr.rel (%p312) target = $region44
      $region43: #{tpu_custom_call.1} parent=5 // pred_region
        %s315 = ssub.s32 %s15, 2
        // Predicated region
        $region45: #{tpu_custom_call.1} parent=43 // pred_check
          %p316 = pneg %p91
        $region46: #{tpu_custom_call.1} parent=43 // pred_check_branch
          %318 = sbr.rel (%p316) target = $region48
        $region47: #{tpu_custom_call.1} parent=43 // pred_region
          %s319 = sand.u32 %s76, 1
          %s320 = scalar_lea.sflag [#allocation4], %s319
          %s321 = sand.u32 %s76, 1
          %s322 = smul.addr %s321, 256
          %s323 = scalar_lea.vmem [#allocation7], %s322
          %324 = dma.done %s320, 4096
        $region48: #{tpu_custom_call.1} parent=43 // pred_fallthru
          _
      $region44: #{tpu_custom_call.1} parent=5 // pred_fallthru
        _
    $region6: #{tpu_custom_call.1} parent=1 // loop_footer
      %s19 = sadd.s32 1, %s15
    $region7: #{tpu_custom_call.1} parent=1 // loop_footer_branch
      %14 = sbr.rel target = $region3
    $region8: #{tpu_custom_call.1} parent=1 // loop_exit
      _
    %325 = vsyncpa [#allocation3], 1
    %s326 = scalar_lea.sflag [#allocation3], 1
    %327 = vsyncpa %s326, 1
    %328 = vsyncpa [#allocation6], 1
    %329 = vsyncpa [#allocation4], 1
    %s330 = scalar_lea.sflag [#allocation4], 1
    %331 = vsyncpa %s330, 1

</llo_original>
